<compile_context>
chip_gen: v5e
topology: v5e:2x2
jax: 0.10.0
libtpu: 0.0.40
codegen_flags: <defaults>
</compile_context>

<pallas_src>
import math

import jax
import jax.numpy as jnp
from jax import lax
from jax.experimental import pallas as pl
from jax.experimental.pallas import tpu as pltpu


def _round_up(n: int, m: int) -> int:
    return ((n + m - 1) // m) * m


def _tokenizer_kernel(x_ref, off_ref, emb_ref, bias_ref, out_ref):
    # x_ref   : (TB, F)     int32   local category indices (batch tile)
    # off_ref : (1, F)      int32   per-feature category offsets
    # emb_ref : (V_pad, D)  float32 zero-padded embedding table (VMEM resident)
    # bias_ref: (1, F*D)    float32 per-feature bias, flattened lane-dense
    # out_ref : (TB, F*D)   float32 lane-dense output tile
    idx = x_ref[...] + off_ref[...]                     # (TB, F) global indices
    tb, n_feat = idx.shape
    v_pad, d = emb_ref.shape

    emb = emb_ref[...]                                  # hoisted, reused per feature
    vocab_iota = lax.broadcasted_iota(jnp.int32, (tb, v_pad), 1)  # built once / step

    toks = []
    for f in range(n_feat):                             # static, small F
        onehot = (idx[:, f:f + 1] == vocab_iota).astype(jnp.float32)   # (TB, V_pad)
        toks.append(jnp.dot(onehot, emb,
                            preferred_element_type=jnp.float32))       # (TB, D) MXU

    out = jnp.concatenate(toks, axis=-1) + bias_ref[...]               # (TB, F*D)
    out_ref[...] = out.astype(out_ref.dtype)


def categorical_feature_tokenizer(x, embeddings, bias, category_offsets,
                                  *, block_b: int = 512):
    """x: (B, F) integer local indices -> (B, F, D) float32 tokens."""
    B, F = x.shape
    V, D = embeddings.shape

    # Pad vocab to a multiple of 128 so the one-hot K-dim is lane aligned.
    V_pad = _round_up(V, 128)
    emb_p = jnp.zeros((V_pad, D), jnp.float32).at[:V].set(
        embeddings.astype(jnp.float32))

    # Batch tile: multiple of 8 sublanes, at most `block_b`, grid covers B_pad.
    tb = min(_round_up(block_b, 8), _round_up(B, 8))
    B_pad = _round_up(B, tb)
    x_p = jnp.zeros((B_pad, F), jnp.int32).at[:B].set(x.astype(jnp.int32))

    off = category_offsets.astype(jnp.int32).reshape(1, F)
    bias_flat = bias.astype(jnp.float32).reshape(1, F * D)

    out_flat = pl.pallas_call(
        _tokenizer_kernel,
        out_shape=jax.ShapeDtypeStruct((B_pad, F * D), jnp.float32),
        grid_spec=pltpu.PrefetchScalarGridSpec(
            num_scalar_prefetch=0,
            grid=(B_pad // tb,),
            in_specs=[
                pl.BlockSpec((tb, F), lambda i: (i, 0)),        # indices tile
                pl.BlockSpec((1, F), lambda i: (0, 0)),         # offsets
                pl.BlockSpec((V_pad, D), lambda i: (0, 0)),     # embedding table
                pl.BlockSpec((1, F * D), lambda i: (0, 0)),     # flat bias
            ],
            out_specs=pl.BlockSpec((tb, F * D), lambda i: (i, 0)),
        ),
        compiler_params=pltpu.CompilerParams(
            dimension_semantics=("parallel",)),
    )(x_p, off, emb_p, bias_flat)

    return out_flat[:B].reshape(B, F, D)


def _reference(x, embeddings, bias, category_offsets):
    return jnp.take(embeddings, x + category_offsets[None, :], axis=0) + bias[None]


if __name__ == "__main__":
    # Module config (small, deterministic)
    cardinalities = [3, 5, 7, 4]           # n_features = 4
    d_token = 32
    F = len(cardinalities)
    V = sum(cardinalities)                  # 19

    key = jax.random.PRNGKey(0)
    k_emb, k_bias, k_x1, k_x2 = jax.random.split(key, 4)

    # _TokenInitialization.UNIFORM: U(-1/sqrt(d), 1/sqrt(d))
    d_sqrt_inv = 1.0 / math.sqrt(d_token)
    embeddings = jax.random.uniform(k_emb, (V, d_token), jnp.float32,
                                    minval=-d_sqrt_inv, maxval=d_sqrt_inv)
    bias = jax.random.uniform(k_bias, (F, d_token), jnp.float32,
                              minval=-d_sqrt_inv, maxval=d_sqrt_inv)

    # category_offsets = cumsum([0] + cardinalities[:-1])
    category_offsets = jnp.cumsum(
        jnp.array([0] + cardinalities[:-1], dtype=jnp.int32))
    cards = jnp.array(cardinalities, dtype=jnp.int32)

    # --- case 1: small batch, single grid step ---
    B1 = 8
    x1 = (jax.random.randint(k_x1, (B1, F), 0, 10_000, dtype=jnp.int32)
          % cards[None, :])
    out1 = jax.block_until_ready(
        categorical_feature_tokenizer(x1, embeddings, bias, category_offsets))
    ref1 = _reference(x1, embeddings, bias, category_offsets)
    assert out1.shape == (B1, F, d_token)
    assert jnp.allclose(out1, ref1, atol=1e-6), "mismatch vs reference (case 1)"

    # --- case 2: batch not a multiple of the tile, multi-step grid ---
    B2 = 300
    x2 = (jax.random.randint(k_x2, (B2, F), 0, 10_000, dtype=jnp.int32)
          % cards[None, :])
    out2 = jax.block_until_ready(
        categorical_feature_tokenizer(x2, embeddings, bias, category_offsets,
                                      block_b=128))
    ref2 = _reference(x2, embeddings, bias, category_offsets)
    assert out2.shape == (B2, F, d_token)
    assert jnp.allclose(out2, ref2, atol=1e-6), "mismatch vs reference (case 2)"

    print("KERNEL_OK")
</pallas_src>

<mosaic_0001>
module attributes {stable_mosaic.version = 11 : i64} {
  func.func @_tokenizer_kernel(%arg0: i32, %arg1: memref<8x4xi32, #tpu.memory_space<vmem>>, %arg2: memref<1x4xi32, #tpu.memory_space<vmem>>, %arg3: memref<128x32xf32, #tpu.memory_space<vmem>>, %arg4: memref<1x128xf32, #tpu.memory_space<vmem>>, %arg5: memref<8x128xf32, #tpu.memory_space<vmem>>) attributes {dimension_semantics = [#tpu.dimension_semantics<parallel>], iteration_bounds = array<i64: 1>, scalar_prefetch = 0 : i64, scratch_operands = 0 : i64, tpu.core_type = #tpu.core_type<tc>, window_params = [{transform_indices = @transform_0, window_bounds = array<i64: 8, 4>}, {pipeline_mode = #tpu.pipeline_mode<synchronous>, transform_indices = @transform_1, window_bounds = array<i64: 1, 4>}, {pipeline_mode = #tpu.pipeline_mode<synchronous>, transform_indices = @transform_2, window_bounds = array<i64: 128, 32>}, {pipeline_mode = #tpu.pipeline_mode<synchronous>, transform_indices = @transform_3, window_bounds = array<i64: 1, 128>}, {transform_indices = @transform_4, window_bounds = array<i64: 8, 128>}]} {
    %c0 = arith.constant 0 : index
    %c0_0 = arith.constant 0 : index
    %0 = vector.load %arg1[%c0, %c0_0] : memref<8x4xi32, #tpu.memory_space<vmem>>, vector<8x4xi32>
    %c0_1 = arith.constant 0 : index
    %c0_2 = arith.constant 0 : index
    %1 = vector.load %arg2[%c0_1, %c0_2] : memref<1x4xi32, #tpu.memory_space<vmem>>, vector<1x4xi32>
    %2 = vector.broadcast %1 : vector<1x4xi32> to vector<8x4xi32>
    %3 = arith.addi %0, %2 : vector<8x4xi32>
    %c0_3 = arith.constant 0 : index
    %c0_4 = arith.constant 0 : index
    %4 = vector.load %arg3[%c0_3, %c0_4] : memref<128x32xf32, #tpu.memory_space<vmem>>, vector<128x32xf32>
    %5 = tpu.iota {dimensions = array<i32: 1>} : vector<8x128xi32>
    %6 = vector.extract_strided_slice %3 {offsets = [0, 0], sizes = [8, 1], strides = [1, 1]} : vector<8x4xi32> to vector<8x1xi32>
    %7 = vector.broadcast %6 : vector<8x1xi32> to vector<8x128xi32>
    %8 = arith.cmpi eq, %7, %5 : vector<8x128xi32>
    %9 = arith.extui %8 : vector<8x128xi1> to vector<8x128xi32>
    %10 = arith.sitofp %9 : vector<8x128xi32> to vector<8x128xf32>
    %cst = arith.constant dense<0.000000e+00> : vector<8x32xf32>
    %11 = tpu.matmul %10, %4, %cst {dimension_numbers = #tpu.dot_dimension_numbers<[1], [0], [0], [1], [0, 0, 1, 1], [], []>} : vector<8x128xf32>, vector<128x32xf32>, vector<8x32xf32> -> vector<8x32xf32>
    %12 = vector.extract_strided_slice %3 {offsets = [0, 1], sizes = [8, 1], strides = [1, 1]} : vector<8x4xi32> to vector<8x1xi32>
    %13 = vector.broadcast %12 : vector<8x1xi32> to vector<8x128xi32>
    %14 = arith.cmpi eq, %13, %5 : vector<8x128xi32>
    %15 = arith.extui %14 : vector<8x128xi1> to vector<8x128xi32>
    %16 = arith.sitofp %15 : vector<8x128xi32> to vector<8x128xf32>
    %cst_5 = arith.constant dense<0.000000e+00> : vector<8x32xf32>
    %17 = tpu.matmul %16, %4, %cst_5 {dimension_numbers = #tpu.dot_dimension_numbers<[1], [0], [0], [1], [0, 0, 1, 1], [], []>} : vector<8x128xf32>, vector<128x32xf32>, vector<8x32xf32> -> vector<8x32xf32>
    %18 = vector.extract_strided_slice %3 {offsets = [0, 2], sizes = [8, 1], strides = [1, 1]} : vector<8x4xi32> to vector<8x1xi32>
    %19 = vector.broadcast %18 : vector<8x1xi32> to vector<8x128xi32>
    %20 = arith.cmpi eq, %19, %5 : vector<8x128xi32>
    %21 = arith.extui %20 : vector<8x128xi1> to vector<8x128xi32>
    %22 = arith.sitofp %21 : vector<8x128xi32> to vector<8x128xf32>
    %cst_6 = arith.constant dense<0.000000e+00> : vector<8x32xf32>
    %23 = tpu.matmul %22, %4, %cst_6 {dimension_numbers = #tpu.dot_dimension_numbers<[1], [0], [0], [1], [0, 0, 1, 1], [], []>} : vector<8x128xf32>, vector<128x32xf32>, vector<8x32xf32> -> vector<8x32xf32>
    %24 = vector.extract_strided_slice %3 {offsets = [0, 3], sizes = [8, 1], strides = [1, 1]} : vector<8x4xi32> to vector<8x1xi32>
    %25 = vector.broadcast %24 : vector<8x1xi32> to vector<8x128xi32>
    %26 = arith.cmpi eq, %25, %5 : vector<8x128xi32>
    %27 = arith.extui %26 : vector<8x128xi1> to vector<8x128xi32>
    %28 = arith.sitofp %27 : vector<8x128xi32> to vector<8x128xf32>
    %cst_7 = arith.constant dense<0.000000e+00> : vector<8x32xf32>
    %29 = tpu.matmul %28, %4, %cst_7 {dimension_numbers = #tpu.dot_dimension_numbers<[1], [0], [0], [1], [0, 0, 1, 1], [], []>} : vector<8x128xf32>, vector<128x32xf32>, vector<8x32xf32> -> vector<8x32xf32>
    %30 = tpu.concatenate %11, %17, %23, %29 in 1 : vector<8x32xf32>, vector<8x32xf32>, vector<8x32xf32>, vector<8x32xf32> -> vector<8x128xf32>
    %c0_8 = arith.constant 0 : index
    %c0_9 = arith.constant 0 : index
    %31 = vector.load %arg4[%c0_8, %c0_9] : memref<1x128xf32, #tpu.memory_space<vmem>>, vector<1x128xf32>
    %32 = vector.broadcast %31 : vector<1x128xf32> to vector<8x128xf32>
    %33 = arith.addf %30, %32 : vector<8x128xf32>
    %c0_10 = arith.constant 0 : index
    %c0_11 = arith.constant 0 : index
    %34 = vector.load %arg5[%c0_10, %c0_11] : memref<8x128xf32, #tpu.memory_space<vmem>>, vector<8x128xf32>
    tpu.vector_store %arg5[%c0_10, %c0_11], %33 {strides = array<i32>} : memref<8x128xf32, #tpu.memory_space<vmem>>, vector<8x128xf32>,
    return
  }
  func.func @transform_0(%arg0: i32) -> (i32, i32) {
    %c0_i32 = arith.constant 0 : i32
    %c0_i32_0 = arith.constant 0 : i32
    return %arg0, %c0_i32 : i32, i32
  }
  func.func @transform_1(%arg0: i32) -> (i32, i32) {
    %c0_i32 = arith.constant 0 : i32
    %c0_i32_0 = arith.constant 0 : i32
    %c0_i32_1 = arith.constant 0 : i32
    return %c0_i32, %c0_i32_0 : i32, i32
  }
  func.func @transform_2(%arg0: i32) -> (i32, i32) {
    %c0_i32 = arith.constant 0 : i32
    %c0_i32_0 = arith.constant 0 : i32
    %c0_i32_1 = arith.constant 0 : i32
    return %c0_i32, %c0_i32_0 : i32, i32
  }
  func.func @transform_3(%arg0: i32) -> (i32, i32) {
    %c0_i32 = arith.constant 0 : i32
    %c0_i32_0 = arith.constant 0 : i32
    %c0_i32_1 = arith.constant 0 : i32
    return %c0_i32, %c0_i32_0 : i32, i32
  }
  func.func @transform_4(%arg0: i32) -> (i32, i32) {
    %c0_i32 = arith.constant 0 : i32
    %c0_i32_0 = arith.constant 0 : i32
    return %arg0, %c0_i32 : i32, i32
  }
}

</mosaic_0001>

<llo_original>
// kernel: tpu_custom_call.1
$region0: #{tpu_custom_call.1}
  #allocation0 [shape = 'u32[]', space=smem, size = 0x4, offset = 0x4, fixed_abs, tag = 'smem constant byte address 0x4 - core index']
  #allocation1 [shape = 'u32[72,128]{1,0:T(1,128)}', space=vmem, size = 0x9000, scoped, tag = 'internal scratch']
  %s0 = inlined_call_operand.vmem [shape: s32[8,4], index: 0, kind: input, shape index: {}]
  %s1 = inlined_call_operand.vmem [shape: s32[1,4], index: 1, kind: input, shape index: {}]
  %s2 = inlined_call_operand.vmem [shape: f32[128,32], index: 2, kind: input, shape index: {}]
  %s3 = inlined_call_operand.vmem [shape: f32[1,128], index: 3, kind: input, shape index: {}]
  %s4 = inlined_call_operand.hbm [shape: f32[8,128], index: 4, kind: output, shape index: {}]
  %s5 = sld [smem:[#allocation0]]
  $region26: #{tpu_custom_call.1} parent=0
    _
  %s7 = ssub.s32 1, %s5
  %s8 = scalar_select 0, %s7, %s5
  $region1: #{tpu_custom_call.1} parent=0
    #allocation2 [shape = 'u8[4096]{0}', space=vmem, size = 0x1000, scoped, tag = 'output window, operand 0, single buffered']
    #allocation3 [shape = 's32[1]{0}', space=sflag, size = 0x4, scoped, tag = 'scoped memory for tpu_custom_call.1']
    %9 = vsyncpa [#allocation3], 0
    // Predicated region
    $region2: #{tpu_custom_call.1} parent=1 // pred_check
      _
    $region3: #{tpu_custom_call.1} parent=1 // pred_check_branch
      %11 = sbr.rel (0) target = $region5
    $region4: #{tpu_custom_call.1} parent=1 // pred_region
      _
    $region5: #{tpu_custom_call.1} parent=1 // pred_fallthru
      _
    // Predicated region
    $region6: #{tpu_custom_call.1} parent=1 // pred_check
      _
    $region7: #{tpu_custom_call.1} parent=1 // pred_check_branch
      %13 = sbr.rel (0) target = $region9
    $region8: #{tpu_custom_call.1} parent=1 // pred_region
      _
    $region9: #{tpu_custom_call.1} parent=1 // pred_fallthru
      _
    // Predicated region
    $region10: #{tpu_custom_call.1} parent=1 // pred_check
      _
    $region11: #{tpu_custom_call.1} parent=1 // pred_check_branch
      %15 = sbr.rel (0) target = $region13
    $region12: #{tpu_custom_call.1} parent=1 // pred_region
      _
    $region13: #{tpu_custom_call.1} parent=1 // pred_fallthru
      _
    // Predicated region
    $region14: #{tpu_custom_call.1} parent=1 // pred_check
      _
    $region15: #{tpu_custom_call.1} parent=1 // pred_check_branch
      %17 = sbr.rel (0) target = $region17
    $region16: #{tpu_custom_call.1} parent=1 // pred_region
      _
    $region17: #{tpu_custom_call.1} parent=1 // pred_fallthru
      _
    %v18 = vld [vmem:[%s0] sm:$0xff]
    %v19 = vld [vmem:[%s1] sm:$0x1]
    %v20 = vperm.slane %v19, 0
    %v21 = vadd.s32 %v18, %v20
    %v22 = vld [vmem:[%s2] sm:$0xff]
    %v23 = vld [vmem:[%s2 + $0x8] sm:$0xff]
    %v24 = vld [vmem:[%s2 + $0x10] sm:$0xff]
    %v25 = vld [vmem:[%s2 + $0x18] sm:$0xff]
    %v26 = vld [vmem:[%s2 + $0x20] sm:$0xff]
    %v27 = vld [vmem:[%s2 + $0x28] sm:$0xff]
    %v28 = vld [vmem:[%s2 + $0x30] sm:$0xff]
    %v29 = vld [vmem:[%s2 + $0x38] sm:$0xff]
    %v30 = vld [vmem:[%s2 + $0x40] sm:$0xff]
    %v31 = vld [vmem:[%s2 + $0x48] sm:$0xff]
    %v32 = vld [vmem:[%s2 + $0x50] sm:$0xff]
    %v33 = vld [vmem:[%s2 + $0x58] sm:$0xff]
    %v34 = vld [vmem:[%s2 + $0x60] sm:$0xff]
    %v35 = vld [vmem:[%s2 + $0x68] sm:$0xff]
    %v36 = vld [vmem:[%s2 + $0x70] sm:$0xff]
    %v37 = vld [vmem:[%s2 + $0x78] sm:$0xff]
    %v38 = vlaneseq
    %v39 = vand.u32 %v38, 127
    %40 = vset.pattern.permute.xlu0 0
    %41 = vperm.xlu0 %40, %v21
    %v42 = vpop.permute.xlu0 %41
    %vm43 = vcmp.eq.s32.totalorder %v42, %v39
    %v44 = vsel %vm43, 1, 0
    %v45 = vcvt.s32.f32 %v44
    %46 = vmatpush.msra.mxu0 %v37
    %47 = vmatpush.msra.mxu0 %v36
    %48 = vmatpush.msra.mxu0 %v35
    %49 = vmatpush.msra.mxu0 %v34
    %50 = vmatpush.msra.mxu0 %v33
    %51 = vmatpush.msra.mxu0 %v32
    %52 = vmatpush.msra.mxu0 %v31
    %53 = vmatpush.msra.mxu0 %v30
    %54 = vmatpush.msra.mxu0 %v29
    %55 = vmatpush.msra.mxu0 %v28
    %56 = vmatpush.msra.mxu0 %v27
    %57 = vmatpush.msra.mxu0 %v26
    %58 = vmatpush.msra.mxu0 %v25
    %59 = vmatpush.msra.mxu0 %v24
    %60 = vmatpush.msra.mxu0 %v23
    %61 = vmatpush.msra.mxu0 %v22
    %62 = vmatmul.f32.gmra.mxu0 %v45
    %v63 = vpop.f32.mrf.mxu0
    %v64 = vadd.f32 0.0, %v63
    %65 = vdwg.mxu0
    %66 = vset.pattern.permute.xlu0 1
    %67 = vperm.xlu0 %66, %v21
    %v68 = vpop.permute.xlu0 %67
    %vm69 = vcmp.eq.s32.totalorder %v68, %v39
    %v70 = vsel %vm69, 1, 0
    %v71 = vcvt.s32.f32 %v70
    %72 = vmatpush.msra.mxu0 %v37
    %73 = vmatpush.msra.mxu0 %v36
    %74 = vmatpush.msra.mxu0 %v35
    %75 = vmatpush.msra.mxu0 %v34
    %76 = vmatpush.msra.mxu0 %v33
    %77 = vmatpush.msra.mxu0 %v32
    %78 = vmatpush.msra.mxu0 %v31
    %79 = vmatpush.msra.mxu0 %v30
    %80 = vmatpush.msra.mxu0 %v29
    %81 = vmatpush.msra.mxu0 %v28
    %82 = vmatpush.msra.mxu0 %v27
    %83 = vmatpush.msra.mxu0 %v26
    %84 = vmatpush.msra.mxu0 %v25
    %85 = vmatpush.msra.mxu0 %v24
    %86 = vmatpush.msra.mxu0 %v23
    %87 = vmatpush.msra.mxu0 %v22
    %88 = vmatmul.f32.gmra.mxu0 %v71
    %v89 = vpop.f32.mrf.mxu0
    %v90 = vadd.f32 0.0, %v89
    %91 = vdwg.mxu0
    %92 = vset.pattern.permute.xlu0 2
    %93 = vperm.xlu0 %92, %v21
    %v94 = vpop.permute.xlu0 %93
    %vm95 = vcmp.eq.s32.totalorder %v94, %v39
    %v96 = vsel %vm95, 1, 0
    %v97 = vcvt.s32.f32 %v96
    %98 = vmatpush.msra.mxu0 %v37
    %99 = vmatpush.msra.mxu0 %v36
    %100 = vmatpush.msra.mxu0 %v35
    %101 = vmatpush.msra.mxu0 %v34
    %102 = vmatpush.msra.mxu0 %v33
    %103 = vmatpush.msra.mxu0 %v32
    %104 = vmatpush.msra.mxu0 %v31
    %105 = vmatpush.msra.mxu0 %v30
    %106 = vmatpush.msra.mxu0 %v29
    %107 = vmatpush.msra.mxu0 %v28
    %108 = vmatpush.msra.mxu0 %v27
    %109 = vmatpush.msra.mxu0 %v26
    %110 = vmatpush.msra.mxu0 %v25
    %111 = vmatpush.msra.mxu0 %v24
    %112 = vmatpush.msra.mxu0 %v23
    %113 = vmatpush.msra.mxu0 %v22
    %114 = vmatmul.f32.gmra.mxu0 %v97
    %v115 = vpop.f32.mrf.mxu0
    %v116 = vadd.f32 0.0, %v115
    %117 = vdwg.mxu0
    %118 = vset.pattern.permute.xlu0 3
    %119 = vperm.xlu0 %118, %v21
    %v120 = vpop.permute.xlu0 %119
    %vm121 = vcmp.eq.s32.totalorder %v120, %v39
    %v122 = vsel %vm121, 1, 0
    %v123 = vcvt.s32.f32 %v122
    %124 = vmatpush.msra.mxu0 %v37
    %125 = vmatpush.msra.mxu0 %v36
    %126 = vmatpush.msra.mxu0 %v35
    %127 = vmatpush.msra.mxu0 %v34
    %128 = vmatpush.msra.mxu0 %v33
    %129 = vmatpush.msra.mxu0 %v32
    %130 = vmatpush.msra.mxu0 %v31
    %131 = vmatpush.msra.mxu0 %v30
    %132 = vmatpush.msra.mxu0 %v29
    %133 = vmatpush.msra.mxu0 %v28
    %134 = vmatpush.msra.mxu0 %v27
    %135 = vmatpush.msra.mxu0 %v26
    %136 = vmatpush.msra.mxu0 %v25
    %137 = vmatpush.msra.mxu0 %v24
    %138 = vmatpush.msra.mxu0 %v23
    %139 = vmatpush.msra.mxu0 %v22
    %140 = vmatmul.f32.gmra.mxu0 %v123
    %v141 = vpop.f32.mrf.mxu0
    %v142 = vadd.f32 0.0, %v141
    %143 = vdwg.mxu0
    %145 = vrot.lane.b32.xlu0 %v90, 32
    %v146 = vpop.permute.xlu0 %145
    %149 = vrot.lane.b32.xlu0 %v116, 64
    %v150 = vpop.permute.xlu0 %149
    %153 = vrot.lane.b32.xlu0 %v142, 96
    %v154 = vpop.permute.xlu0 %153
    %vm156 = vcmask 261120
    %v157 = vsel %vm156, %v64, %v146
    %vm158 = vcmask 523264
    %v159 = vsel %vm158, %v157, %v150
    %vm160 = vcmask 785408
    %v161 = vsel %vm160, %v159, %v154
    %v162 = vld [vmem:[%s3] sm:$0x1]
    %v164 = vperm.slane %v162, 0
    %v166 = vadd.f32 %v161, %v164
    %167 = vst [vmem:[#allocation2] sm:$0xff] %v166
    // Predicated region
    $region18: #{tpu_custom_call.1} parent=1 // pred_check
      _
    $region19: #{tpu_custom_call.1} parent=1 // pred_check_branch
      %169 = sbr.rel (0) target = $region21
    $region20: #{tpu_custom_call.1} parent=1 // pred_region
      %171 = vsyncadd [#allocation3], 0
      %s173 = sshll.u32 [#allocation2], 4
      %s174 = int_to_ptr.vmem [resolvable:$true] %s173
      %s175 = sshll.u32 %s4, 4
      %s176 = int_to_ptr.hbm [resolvable:$true] %s175
      %178 = dma.vmem_to_hbm [thread:$0]  %s174, 128, %s176, [#allocation3]
    $region21: #{tpu_custom_call.1} parent=1 // pred_fallthru
      _
    // Predicated region
    $region22: #{tpu_custom_call.1} parent=1 // pred_check
      _
    $region23: #{tpu_custom_call.1} parent=1 // pred_check_branch
      %180 = sbr.rel (0) target = $region25
    $region24: #{tpu_custom_call.1} parent=1 // pred_region
      %182 = dma.done [#allocation3], 128
    $region25: #{tpu_custom_call.1} parent=1 // pred_fallthru
      _
    %183 = vsyncpa [#allocation3], 1

</llo_original>
